<compile_context>
chip_gen: v7x
topology: tpu7x:2x2x1
jax: 0.10.0
libtpu: 0.0.40
codegen_flags: <defaults>
</compile_context>

<pallas_src>
import math
import warnings

import jax
import jax.numpy as jnp
from jax.experimental import pallas as pl
from jax.experimental.pallas import tpu as pltpu

_TILE_BYTES = 4 << 20      # ~4 MiB per x/out tile (perf review: 2-4 MiB sweet spot)
_VMEM_LIMIT = 40 << 20     # 6 double-buffered tiles (~24 MiB) + headroom; < v7x ~48 MiB cap


def _build_pe_table(d_model: int, max_len: int = 512) -> jnp.ndarray:
    """Sinusoidal PE table, shape (max_len, d_model) — matches the PyTorch module."""
    position = jnp.arange(max_len, dtype=jnp.float32)[:, None]
    div_term = jnp.exp(
        jnp.arange(0, d_model, 2, dtype=jnp.float32) * (-math.log(10000.0) / d_model)
    )
    ang = position * div_term
    pe = jnp.zeros((max_len, d_model), dtype=jnp.float32)
    pe = pe.at[:, 0::2].set(jnp.sin(ang))
    pe = pe.at[:, 1::2].set(jnp.cos(ang))
    return pe


def _add_pe_kernel(x_ref, pe_ref, o_ref):
    # x_ref/o_ref: (tr, tc) or (bb, tr, tc); pe_ref: (tr, tc).
    # Broadcast over the leading (non-lane/sublane) dim is free on the VPU.
    o_ref[...] = (x_ref[...] + pe_ref[...]).astype(o_ref.dtype)


def _fold_factor(S: int, D: int):
    """Smallest k dividing S such that (k*D) % 128 == 0 (lane-dense folded last dim)."""
    if D % 128 == 0:
        return 1
    for k in range(2, S + 1):
        if S % k == 0 and (k * D) % 128 == 0:
            return k
    return None  # unfoldable: keep (S, D) blocks (sublanes occupied, no (1, S*D) flatten)


def positional_encoding(x: jnp.ndarray, pe_table: jnp.ndarray) -> jnp.ndarray:
    """x: (B, S, D); pe_table: (max_len, D). Returns x + pe[:S] (broadcast over batch)."""
    B, S, D = x.shape
    max_len = pe_table.shape[0]
    if S > max_len:
        raise ValueError(f"seq_len {S} exceeds max_len {max_len}")

    # Pre-cast PE once in the wrapper (halves PE DMA bytes for bf16 x, single-dtype add).
    pe = pe_table[:S, :].astype(x.dtype)

    itemsize = x.dtype.itemsize
    sub = max(8, 32 // itemsize)  # native sublane packing: 8 f32, 16 bf16, 32 int8/fp8

    # Lane-dense folding: (B, S, D) -> (B, S/k, k*D); PE folds identically.
    k = _fold_factor(S, D)
    if k is None:
        Sf, Df = S, D  # lane dim stays D (full array dim => legal block); rows tiled below
    else:
        Sf, Df = S // k, k * D
    xf = x.reshape(B, Sf, Df)
    pef = pe.reshape(Sf, Df)

    slab_bytes = Sf * Df * itemsize
    cost = pl.CostEstimate(
        flops=B * S * D,
        transcendentals=0,
        bytes_accessed=(2 * B * S * D + S * D) * itemsize,
    )

    if slab_bytes <= _TILE_BYTES:
        # ---- Case A: small per-batch slab -> pack bb batches per grid step. ----
        bb_budget = max(1, _TILE_BYTES // max(slab_bytes, 1))
        # Largest divisor of B that fits the budget; for B >= 2 keep >= 2 grid steps so
        # the v7x megacore always has a non-unit "parallel" axis (no-op on v5e/v6e).
        bb_cap = min(bb_budget, B if B < 2 else max(1, B // 2))
        bb = max(d for d in range(1, bb_cap + 1) if B % d == 0)
        grid = (B // bb,)
        out = pl.pallas_call(
            _add_pe_kernel,
            out_shape=jax.ShapeDtypeStruct((B, Sf, Df), x.dtype),
            grid_spec=pltpu.PrefetchScalarGridSpec(
                num_scalar_prefetch=0,
                grid=grid,
                in_specs=[
                    pl.BlockSpec((bb, Sf, Df), lambda i: (i, 0, 0)),
                    # Constant block index -> PE DMA'd once, stays resident in VMEM.
                    pl.BlockSpec((Sf, Df), lambda i: (0, 0)),
                ],
                out_specs=pl.BlockSpec((bb, Sf, Df), lambda i: (i, 0, 0)),
            ),
            compiler_params=pltpu.CompilerParams(
                dimension_semantics=("parallel",),
                vmem_limit_bytes=_VMEM_LIMIT,
            ),
            cost_estimate=cost,
            input_output_aliases={0: 0},
        )(xf, pef)
    else:
        # ---- Case B: 3-D grid (rows, cols, batch), batch innermost -> PE resident. ----
        # Column (lane) tile: full Df if it fits / unaligned, else balanced multiple of 128.
        col_budget = max(128, (_TILE_BYTES // (sub * itemsize)) // 128 * 128)
        if Df <= col_budget or Df % 128 != 0:
            tc, nc = Df, 1
        else:
            nc = pl.cdiv(Df, col_budget)
            tc = (pl.cdiv(Df, nc) + 127) // 128 * 128  # load-balanced, 128-aligned
            nc = pl.cdiv(Df, tc)
        # Row (sublane) tile: full Sf if it fits, else balanced multiple of the packing.
        row_budget = max(sub, (_TILE_BYTES // (tc * itemsize)) // sub * sub)
        if Sf <= row_budget:
            tr, nr = Sf, 1
        else:
            nr = pl.cdiv(Sf, row_budget)
            tr = (pl.cdiv(Sf, nr) + sub - 1) // sub * sub  # load-balanced, packed sublanes
            nr = pl.cdiv(Sf, tr)
        grid = (nr, nc, B)
        out = pl.pallas_call(
            _add_pe_kernel,
            out_shape=jax.ShapeDtypeStruct((B, Sf, Df), x.dtype),
            grid_spec=pltpu.PrefetchScalarGridSpec(
                num_scalar_prefetch=0,
                grid=grid,
                in_specs=[
                    # Batch dim squeezed out of the kernel view -> (tr, tc) tile.
                    pl.BlockSpec((None, tr, tc), lambda r, c, b: (b, r, c)),
                    # PE block index independent of b: no re-DMA across the batch sweep.
                    pl.BlockSpec((tr, tc), lambda r, c, b: (r, c)),
                ],
                out_specs=pl.BlockSpec((None, tr, tc), lambda r, c, b: (b, r, c)),
            ),
            compiler_params=pltpu.CompilerParams(
                dimension_semantics=("parallel", "parallel", "arbitrary"),
                vmem_limit_bytes=_VMEM_LIMIT,
            ),
            cost_estimate=cost,
            input_output_aliases={0: 0},
        )(xf, pef)

    return out.reshape(B, S, D)


if __name__ == "__main__":
    # Keep stdout/stderr clean if XLA cannot alias through a particular reshape.
    warnings.filterwarnings("ignore", message="Some donated buffers were not usable")

    MAX_LEN = 512
    # Donate x so input_output_aliases={0: 0} is a true in-place add (no defensive copy).
    # Callers that still need x afterwards should jit without donate_argnums.
    pos_enc = jax.jit(positional_encoding, donate_argnums=0)

    # Shapes consistent with the module's forward: (batch, seq_len, d_model).
    B, S, D = 2, 8, 32
    key = jax.random.PRNGKey(0)
    x = jax.random.normal(key, (B, S, D), dtype=jnp.float32)
    pe_table = _build_pe_table(D, MAX_LEN)

    ref = x + pe_table[None, :S, :]          # reference computed BEFORE donating x
    out = jax.block_until_ready(pos_enc(x, pe_table))
    assert out.shape == (B, S, D)
    assert jnp.allclose(out, ref, atol=1e-6), "mismatch vs reference (D=32 folded path)"

    # Second small check exercising the D % 128 == 0 (no-fold) path.
    B2, S2, D2 = 2, 8, 128
    x2 = jax.random.normal(jax.random.PRNGKey(1), (B2, S2, D2), dtype=jnp.float32)
    pe_table2 = _build_pe_table(D2, MAX_LEN)
    ref2 = x2 + pe_table2[None, :S2, :]
    out2 = jax.block_until_ready(pos_enc(x2, pe_table2))
    assert jnp.allclose(out2, ref2, atol=1e-6), "mismatch vs reference (D=128 path)"

    print("KERNEL_OK")
</pallas_src>

<mosaic_0001>
module attributes {stable_mosaic.version = 11 : i64} {
  func.func @_add_pe_kernel(%arg0: i32, %arg1: memref<1x2x128xf32, #tpu.memory_space<vmem>>, %arg2: memref<2x128xf32, #tpu.memory_space<vmem>>, %arg3: memref<1x2x128xf32, #tpu.memory_space<vmem>>) attributes {dimension_semantics = [#tpu.dimension_semantics<parallel>], iteration_bounds = array<i64: 2>, scalar_prefetch = 0 : i64, scratch_operands = 0 : i64, tpu.core_type = #tpu.core_type<tc>, window_params = [{transform_indices = @transform_0, window_bounds = array<i64: 1, 2, 128>}, {pipeline_mode = #tpu.pipeline_mode<synchronous>, transform_indices = @transform_1, window_bounds = array<i64: 2, 128>}, {transform_indices = @transform_2, window_bounds = array<i64: 1, 2, 128>}]} {
    %c0 = arith.constant 0 : index
    %c0_0 = arith.constant 0 : index
    %c0_1 = arith.constant 0 : index
    %0 = vector.load %arg1[%c0, %c0_0, %c0_1] : memref<1x2x128xf32, #tpu.memory_space<vmem>>, vector<1x2x128xf32>
    %c0_2 = arith.constant 0 : index
    %c0_3 = arith.constant 0 : index
    %1 = vector.load %arg2[%c0_2, %c0_3] : memref<2x128xf32, #tpu.memory_space<vmem>>, vector<2x128xf32>
    %2 = vector.shape_cast %1 : vector<2x128xf32> to vector<1x2x128xf32>
    %3 = arith.addf %0, %2 : vector<1x2x128xf32>
    %c0_4 = arith.constant 0 : index
    %c0_5 = arith.constant 0 : index
    %c0_6 = arith.constant 0 : index
    %4 = vector.load %arg3[%c0_4, %c0_5, %c0_6] : memref<1x2x128xf32, #tpu.memory_space<vmem>>, vector<1x2x128xf32>
    tpu.vector_store %arg3[%c0_4, %c0_5, %c0_6], %3 {strides = array<i32>} : memref<1x2x128xf32, #tpu.memory_space<vmem>>, vector<1x2x128xf32>,
    return
  }
  func.func @transform_0(%arg0: i32) -> (i32, i32, i32) {
    %c0_i32 = arith.constant 0 : i32
    %c0_i32_0 = arith.constant 0 : i32
    %c0_i32_1 = arith.constant 0 : i32
    return %arg0, %c0_i32, %c0_i32_0 : i32, i32, i32
  }
  func.func @transform_1(%arg0: i32) -> (i32, i32) {
    %c0_i32 = arith.constant 0 : i32
    %c0_i32_0 = arith.constant 0 : i32
    %c0_i32_1 = arith.constant 0 : i32
    return %c0_i32, %c0_i32_0 : i32, i32
  }
  func.func @transform_2(%arg0: i32) -> (i32, i32, i32) {
    %c0_i32 = arith.constant 0 : i32
    %c0_i32_0 = arith.constant 0 : i32
    %c0_i32_1 = arith.constant 0 : i32
    return %arg0, %c0_i32, %c0_i32_0 : i32, i32, i32
  }
}

</mosaic_0001>

<llo_original>
// kernel: positional_encoding.1
$region0: #{positional_encoding.1}
  #allocation0 [shape = 'u32[]', space=smem, size = 0x4, offset = 0x4, fixed_abs, tag = 'smem constant byte address 0x4 - core index']
  #allocation1 [shape = 'u32[144,128]{1,0:T(1,128)}', space=vmem, size = 0x12000, scoped, tag = 'internal scratch']
  %s0 = inlined_call_operand.vmem [shape: f32[2,2,128], index: 0, kind: input, shape index: {}, may-alias: {0,2}]
  %s1 = inlined_call_operand.vmem [shape: f32[2,128], index: 1, kind: input, shape index: {}]
  %s2 = inlined_call_operand.vmem [shape: f32[2,2,128], index: 2, kind: output, shape index: {}, may-alias: {0,2}]
  %s3 = sld [smem:[#allocation0]]
  $region41: #{positional_encoding.1} parent=0
    _
  %s5 = ssub.s32 1, %s3
  %s6 = scalar_select 0, %s5, %s3
  loop: start=0, step=1, limit=4
  $region2: #{positional_encoding.1} parent=0 // loop_pre_header
    _
  $region3: #{positional_encoding.1} parent=0 // loop_header
    %s8 = sphi 0, %s12
    %p9 = scmp.ge.s32.totalorder %s8, 4
    %s18 = sphi 0, %s20
    %s21 = sphi 0, %s18
    %s22 = sphi 0, %s21
    %s38 = sphi 0, %s22
    %s42 = sphi 0, %s42
    %s44 = sphi 0, %s42
    %s45 = sphi 0, %s44
    %s59 = sphi 0, %s45
    %s65 = sphi 0, %s67
    %s68 = sphi 0, %s65
    %s69 = sphi 0, %s68
    %s85 = sphi 0, %s69
  $region4: #{positional_encoding.1} parent=0 // loop_header_branch
    %11 = sbr.rel (%p9) target = $region8
  $region5: #{positional_encoding.1} parent=0 // loop_body
    %s13 = ssub.s32 %s8, 1
    %s14 = ssub.s32 %s8, 2
    %s15 = sadd.s32 %s8, 1
    %s16 = ssub.s32 %s8, %s15
    %p17 = scmp.eq.s32.totalorder %s16, 0
    %s19 = sadd.s32 %s18, 1
    %s20 = scalar_select %p17, %s18, %s19
    %p23 = pneg %p17
    %p24 = scmp.eq.s32.totalorder %s8, 1
    %p25 = por %p23, %p24
    %p26 = scmp.ne.s32.totalorder %s18, %s21
    %p27 = scmp.eq.s32.totalorder %s8, 0
    %p28 = por %p26, %p27
    %p29 = scmp.ne.s32.totalorder %s18, %s21
    %p30 = scmp.eq.s32.totalorder %s13, 1
    %p31 = por %p29, %p30
    %p32 = scmp.ne.s32.totalorder %s21, %s22
    %p33 = scmp.eq.s32.totalorder %s13, 0
    %p34 = por %p32, %p33
    %p35 = scmp.ne.s32.totalorder %s21, %s22
    %p36 = scmp.eq.s32.totalorder %s14, 1
    %p37 = por %p35, %p36
    %p39 = scmp.ne.s32.totalorder %s22, %s38
    %p40 = scmp.eq.s32.totalorder %s14, 0
    %p41 = por %p39, %p40
    %s43 = sadd.s32 %s42, 1
    %p46 = scmp.eq.s32.totalorder %s8, 1
    %p47 = scmp.ne.s32.totalorder %s42, %s44
    %p48 = scmp.eq.s32.totalorder %s8, 0
    %p49 = por %p47, %p48
    %p50 = scmp.ne.s32.totalorder %s42, %s44
    %p51 = scmp.eq.s32.totalorder %s13, 1
    %p52 = por %p50, %p51
    %p53 = scmp.ne.s32.totalorder %s44, %s45
    %p54 = scmp.eq.s32.totalorder %s13, 0
    %p55 = por %p53, %p54
    %p56 = scmp.ne.s32.totalorder %s44, %s45
    %p57 = scmp.eq.s32.totalorder %s14, 1
    %p58 = por %p56, %p57
    %p60 = scmp.ne.s32.totalorder %s45, %s59
    %p61 = scmp.eq.s32.totalorder %s14, 0
    %p62 = por %p60, %p61
    %s63 = ssub.s32 %s8, %s15
    %p64 = scmp.eq.s32.totalorder %s63, 0
    %s66 = sadd.s32 %s65, 1
    %s67 = scalar_select %p64, %s65, %s66
    %p70 = pneg %p64
    %p71 = scmp.eq.s32.totalorder %s8, 1
    %p72 = por %p70, %p71
    %p73 = scmp.ne.s32.totalorder %s65, %s68
    %p74 = scmp.eq.s32.totalorder %s8, 0
    %p75 = por %p73, %p74
    %p76 = scmp.ne.s32.totalorder %s65, %s68
    %p77 = scmp.eq.s32.totalorder %s13, 1
    %p78 = por %p76, %p77
    %p79 = scmp.ne.s32.totalorder %s68, %s69
    %p80 = scmp.eq.s32.totalorder %s13, 0
    %p81 = por %p79, %p80
    %p82 = scmp.ne.s32.totalorder %s68, %s69
    %p83 = scmp.eq.s32.totalorder %s14, 1
    %p84 = por %p82, %p83
    %p86 = scmp.ne.s32.totalorder %s69, %s85
    %p87 = scmp.eq.s32.totalorder %s14, 0
    %p88 = por %p86, %p87
    %p89 = scmp.le.s32.totalorder 1, %s8
    %p90 = scmp.lt.s32.totalorder %s8, 3
    %p91 = pnand %p89, %p90
    %p92 = pneg %p91
    // Predicated region
    $region9: #{positional_encoding.1} parent=5 // pred_check
      _
    $region10: #{positional_encoding.1} parent=5 // pred_check_branch
      %94 = sbr.rel (%p91) target = $region12
    $region11: #{positional_encoding.1} parent=5 // pred_region
      %s95 = ssub.s32 %s8, 1
      // Predicated region
      $region13: #{positional_encoding.1} parent=11 // pred_check
        %p96 = pneg %p55
      $region14: #{positional_encoding.1} parent=11 // pred_check_branch
        %98 = sbr.rel (%p96) target = $region16
      $region15: #{positional_encoding.1} parent=11 // pred_region
        _
      $region16: #{positional_encoding.1} parent=11 // pred_fallthru
        _
    $region12: #{positional_encoding.1} parent=5 // pred_fallthru
      _
    %p99 = scmp.lt.s32.totalorder %s8, 2
    // Predicated region
    $region17: #{positional_encoding.1} parent=5 // pred_check
      %p100 = pneg %p99
    $region18: #{positional_encoding.1} parent=5 // pred_check_branch
      %102 = sbr.rel (%p100) target = $region20
    $region19: #{positional_encoding.1} parent=5 // pred_region
      // Predicated region
      $region21: #{positional_encoding.1} parent=19 // pred_check
        %p103 = pneg %p28
      $region22: #{positional_encoding.1} parent=19 // pred_check_branch
        %105 = sbr.rel (%p103) target = $region24
      $region23: #{positional_encoding.1} parent=19 // pred_region
        %p106 = scmp.lt.s32.totalorder %s8, 1
        %s107 = scalar_select %p106, %s8, 1
        %s108 = smul.addr %s107, 2
        %s109 = scalar_lea.vmem %s0, %s108
      $region24: #{positional_encoding.1} parent=19 // pred_fallthru
        _
    $region20: #{positional_encoding.1} parent=5 // pred_fallthru
      _
    %p110 = scmp.le.s32.totalorder 1, %s8
    %p111 = scmp.lt.s32.totalorder %s8, 3
    %p112 = pnand %p110, %p111
    %p113 = pneg %p112
    // Predicated region
    $region25: #{positional_encoding.1} parent=5 // pred_check
      _
    $region26: #{positional_encoding.1} parent=5 // pred_check_branch
      %115 = sbr.rel (%p112) target = $region28
    $region27: #{positional_encoding.1} parent=5 // pred_region
      %s116 = ssub.s32 %s8, 1
      %p117 = scmp.lt.s32.totalorder %s13, 1
      %s118 = scalar_select %p117, %s13, 1
      %s119 = smul.addr %s118, 2
      %s120 = scalar_lea.vmem %s0, %s119
      %p121 = pneg %p34
      %p122 = pneg %p31
      %p123 = pneg %p55
      %p124 = pneg %p52
      %p125 = pneg %p81
      %p126 = pneg %p78
      %p127 = scmp.lt.s32.totalorder %s13, 1
      %s128 = scalar_select %p127, %s13, 1
      %s129 = smul.addr %s128, 2
      %s130 = scalar_lea.vmem %s2, %s129
      %p131 = scmp.lt.s32.totalorder %s13, 1
      %s132 = scalar_select %p131, %s13, 1
      %s133 = smul.addr %s132, 2
      %s134 = scalar_lea.vmem %s0, %s133
      %p135 = scmp.lt.s32.totalorder %s13, 1
      %s136 = scalar_select %p135, %s13, 1
      %s137 = smul.addr %s136, 2
      %s138 = scalar_lea.vmem %s2, %s137
      %v139 = vld [vmem:[%s134] sm:$0x3]
      %v140 = vld [vmem:[%s1] sm:$0x3]
      %v141 = vadd.f32 %v139, %v140
      %142 = vst [vmem:[%s138] sm:$0x3] %v141
      %p143 = scmp.lt.s32.totalorder %s13, 1
      %s144 = scalar_select %p143, %s13, 1
      %s145 = smul.addr %s144, 2
      %s146 = scalar_lea.vmem %s2, %s145
      // Predicated region
      $region29: #{positional_encoding.1} parent=27 // pred_check
        %p147 = pneg %p78
      $region30: #{positional_encoding.1} parent=27 // pred_check_branch
        %149 = sbr.rel (%p147) target = $region32
      $region31: #{positional_encoding.1} parent=27 // pred_region
        _
      $region32: #{positional_encoding.1} parent=27 // pred_fallthru
        _
    $region28: #{positional_encoding.1} parent=5 // pred_fallthru
      _
    %p150 = scmp.le.s32.totalorder 2, %s8
    // Predicated region
    $region33: #{positional_encoding.1} parent=5 // pred_check
      %p151 = pneg %p150
    $region34: #{positional_encoding.1} parent=5 // pred_check_branch
      %153 = sbr.rel (%p151) target = $region36
    $region35: #{positional_encoding.1} parent=5 // pred_region
      %s154 = ssub.s32 %s8, 2
      // Predicated region
      $region37: #{positional_encoding.1} parent=35 // pred_check
        %p155 = pneg %p84
      $region38: #{positional_encoding.1} parent=35 // pred_check_branch
        %157 = sbr.rel (%p155) target = $region40
      $region39: #{positional_encoding.1} parent=35 // pred_region
        %p158 = scmp.lt.s32.totalorder %s14, 1
        %s159 = scalar_select %p158, %s14, 1
        %s160 = smul.addr %s159, 2
        %s161 = scalar_lea.vmem %s2, %s160
      $region40: #{positional_encoding.1} parent=35 // pred_fallthru
        _
    $region36: #{positional_encoding.1} parent=5 // pred_fallthru
      _
  $region6: #{positional_encoding.1} parent=0 // loop_footer
    %s12 = sadd.s32 1, %s8
  $region7: #{positional_encoding.1} parent=0 // loop_footer_branch
    %7 = sbr.rel target = $region3
  $region8: #{positional_encoding.1} parent=0 // loop_exit
    _

</llo_original>
